<compile_context>
chip_gen: v7x
topology: tpu7x:2x2x1
jax: 0.10.0
libtpu: 0.0.40
codegen_flags: <defaults>
</compile_context>

<pallas_src>
import functools

import jax
import jax.numpy as jnp
from jax.experimental import pallas as pl
from jax.experimental.pallas import tpu as pltpu

LANES = 128
SUBLANES = 8
_VMEM_LIMIT = 32 * 1024 * 1024   # safe on v5e/v6e/v7x; working set is ~4 MiB
_TILE_ROWS_CAP = 2048            # 2048 x 128 x 4B = 1 MiB f32 blocks


def get_quantized_range(bitwidth):
    quantized_max = (1 << (bitwidth - 1)) - 1
    quantized_min = -(1 << (bitwidth - 1))
    return quantized_min, quantized_max


def _pick_tile_rows(rows, cap):
    """Largest multiple of 8 <= min(rows, cap); grid uses cdiv + in-kernel mask."""
    t = min(rows, cap)
    t -= t % SUBLANES
    return max(t, SUBLANES)


# ------------------------------------------------------------------
# Kernel 1: per-tile partial min/max (parallel grid, lane-dense outputs)
# ------------------------------------------------------------------
def _minmax_kernel(x_ref, min_ref, max_ref, *, tile_rows, valid_rows):
    x = x_ref[...].astype(jnp.float32)                 # (tile_rows, 128)
    if valid_rows is not None:
        # Ragged last tile: rows past the logical end hold undefined data,
        # so neutralize them for the reduction.
        row0 = pl.program_id(0) * tile_rows
        rid = row0 + jax.lax.broadcasted_iota(jnp.int32, x.shape, 0)
        ok = rid < valid_rows
        x_min = jnp.where(ok, x, jnp.inf)
        x_max = jnp.where(ok, x, -jnp.inf)
    else:
        x_min = x_max = x
    # Reduce over sublane groups: elementwise VPU min/max across vregs,
    # leaving a lane-dense (8, 128) partial per tile.
    min_ref[...] = jnp.min(x_min.reshape(-1, SUBLANES, LANES), axis=0)
    max_ref[...] = jnp.max(x_max.reshape(-1, SUBLANES, LANES), axis=0)


def _global_minmax(x2d, tile_rows):
    rows, cols = x2d.shape
    num_tiles = pl.cdiv(rows, tile_rows)
    kernel = functools.partial(
        _minmax_kernel,
        tile_rows=tile_rows,
        valid_rows=None if rows % tile_rows == 0 else rows,
    )
    pmin, pmax = pl.pallas_call(
        kernel,
        out_shape=(
            jax.ShapeDtypeStruct((num_tiles * SUBLANES, cols), jnp.float32),
            jax.ShapeDtypeStruct((num_tiles * SUBLANES, cols), jnp.float32),
        ),
        grid_spec=pltpu.PrefetchScalarGridSpec(
            num_scalar_prefetch=0,
            grid=(num_tiles,),
            in_specs=[pl.BlockSpec((tile_rows, cols), lambda i: (i, 0))],
            out_specs=(
                pl.BlockSpec((SUBLANES, cols), lambda i: (i, 0)),
                pl.BlockSpec((SUBLANES, cols), lambda i: (i, 0)),
            ),
        ),
        compiler_params=pltpu.CompilerParams(
            # TODO(synk): on v7x verify both TensorCores pick up grid steps;
            # switch to pltpu.CORE_PARALLEL if xprof shows a single-core run.
            dimension_semantics=("parallel",),
            vmem_limit_bytes=_VMEM_LIMIT,
        ),
    )(x2d)
    # Tiny final reduction over the partials; fused into the jit'd glue.
    return jnp.min(pmin), jnp.max(pmax)


# ------------------------------------------------------------------
# Kernel 2: elementwise fake quantization (multiply by reciprocal)
# ------------------------------------------------------------------
def _fake_quant_kernel(params_ref, x_ref, o_ref, *, qmin, qmax):
    inv_scale = params_ref[0]
    zp = params_ref[1]
    scale = params_ref[2]
    x = x_ref[...].astype(jnp.float32)
    # NOTE: x * inv_scale instead of PyTorch's x / scale: can flip exact
    # round-half-to-even ties (<= 1 quantum); keeps the pass HBM-bound.
    q = jnp.clip(jnp.round(x * inv_scale) + zp, float(qmin), float(qmax))
    o_ref[...] = ((q - zp) * scale).astype(o_ref.dtype)


@functools.partial(jax.jit, static_argnames=("bitwidth", "tile_rows_cap"))
def fake_quantize(x, bitwidth=8, tile_rows_cap=_TILE_ROWS_CAP):
    """Pallas implementation of FakeQuantize.forward (training mode)."""
    qmin, qmax = get_quantized_range(bitwidth)
    orig_shape = x.shape
    orig_dtype = x.dtype

    xf = x.reshape(-1)                     # keep original dtype through HBM
    total = xf.size

    # Lane padding only when numel is not a multiple of 128 (rare for NN
    # activations).  Edge padding leaves the global min/max unchanged.
    # TODO(synk): handle the <128-element ragged lane tail in-kernel to avoid
    # this whole-array copy on unaligned sizes.
    lane_pad = (-total) % LANES
    if lane_pad:
        xf = jnp.pad(xf, (0, lane_pad), mode="edge")
    rows = xf.size // LANES
    x2d = xf.reshape(rows, LANES)

    tile_rows = _pick_tile_rows(rows, tile_rows_cap)
    num_tiles = pl.cdiv(rows, tile_rows)

    # --- pass 1: global min/max (parallel partial-reduction kernel) ---
    fp_min, fp_max = _global_minmax(x2d, tile_rows)

    # --- scalar glue (fused under jit): scale / zero_point ---
    scale = (fp_max - fp_min) / float(qmax - qmin)
    # TODO(synk): PyTorch's raw formula has no guard; only differs for
    # exactly-constant inputs (where PyTorch would divide by zero).
    scale = jnp.maximum(scale, jnp.float32(1e-12))
    zero_point = jnp.clip(jnp.round(qmin - fp_min / scale), qmin, qmax)
    inv_scale = 1.0 / scale
    params = jnp.stack([inv_scale, zero_point, scale]).astype(jnp.float32)

    # --- pass 2: elementwise fake quantization ---
    kernel = functools.partial(_fake_quant_kernel, qmin=qmin, qmax=qmax)
    y2d = pl.pallas_call(
        kernel,
        out_shape=jax.ShapeDtypeStruct((rows, LANES), orig_dtype),
        grid_spec=pltpu.PrefetchScalarGridSpec(
            num_scalar_prefetch=0,
            grid=(num_tiles,),
            in_specs=[
                pl.BlockSpec(memory_space=pltpu.MemorySpace.SMEM),  # [1/s, zp, s]
                pl.BlockSpec((tile_rows, LANES), lambda i: (i, 0)),
            ],
            out_specs=pl.BlockSpec((tile_rows, LANES), lambda i: (i, 0)),
        ),
        compiler_params=pltpu.CompilerParams(
            dimension_semantics=("parallel",),
            vmem_limit_bytes=_VMEM_LIMIT,
        ),
    )(params, x2d)

    y = y2d.reshape(-1)
    if lane_pad:
        y = y[:total]
    return y.reshape(orig_shape)


# ------------------------------------------------------------------
# Pure-JAX reference for verification.
# Mirrors the kernel's reciprocal-multiply so the self-test is not flaky on
# rounding ties (PyTorch itself uses x / scale).
# ------------------------------------------------------------------
def _reference(x, bitwidth=8):
    qmin, qmax = get_quantized_range(bitwidth)
    xf = x.astype(jnp.float32)
    fp_max = jnp.max(xf)
    fp_min = jnp.min(xf)
    scale = (fp_max - fp_min) / (qmax - qmin)
    scale = jnp.maximum(scale, jnp.float32(1e-12))
    zp = jnp.clip(jnp.round(qmin - fp_min / scale), qmin, qmax)
    inv_scale = 1.0 / scale
    clamped = jnp.clip(jnp.round(xf * inv_scale) + zp, qmin, qmax)
    return ((clamped - zp) * scale).astype(x.dtype)


if __name__ == "__main__":
    key = jax.random.PRNGKey(0)
    # NCHW input, as a typical conv activation: batch=2, channels=4, 16x16 spatial
    x = jax.random.normal(key, (2, 4, 16, 16), dtype=jnp.float32)

    y = fake_quantize(x, bitwidth=8)
    y = jax.block_until_ready(y)

    y_ref = _reference(x, bitwidth=8)
    assert y.shape == x.shape and y.dtype == x.dtype
    assert jnp.allclose(y, y_ref, atol=1e-5, rtol=1e-5), "mismatch vs reference"

    print("KERNEL_OK")
</pallas_src>

<mosaic_0001>
module attributes {stable_mosaic.version = 11 : i64} {
  func.func @_minmax_kernel(%arg0: i32, %arg1: memref<16x128xf32, #tpu.memory_space<vmem>>, %arg2: memref<8x128xf32, #tpu.memory_space<vmem>>, %arg3: memref<8x128xf32, #tpu.memory_space<vmem>>) attributes {dimension_semantics = [#tpu.dimension_semantics<parallel>], iteration_bounds = array<i64: 1>, scalar_prefetch = 0 : i64, scratch_operands = 0 : i64, tpu.core_type = #tpu.core_type<tc>, window_params = [{transform_indices = @transform_0, window_bounds = array<i64: 16, 128>}, {transform_indices = @transform_1, window_bounds = array<i64: 8, 128>}, {transform_indices = @transform_2, window_bounds = array<i64: 8, 128>}]} {
    %c0 = arith.constant 0 : index
    %c0_0 = arith.constant 0 : index
    %0 = vector.load %arg1[%c0, %c0_0] : memref<16x128xf32, #tpu.memory_space<vmem>>, vector<16x128xf32>
    %1 = vector.shape_cast %0 : vector<16x128xf32> to vector<2x8x128xf32>
    %cst = arith.constant dense<0x7F800000> : vector<8x128xf32>
    %2 = vector.multi_reduction <minimumf>, %1, %cst [0] : vector<2x8x128xf32> to vector<8x128xf32>
    %c0_1 = arith.constant 0 : index
    %c0_2 = arith.constant 0 : index
    %3 = vector.load %arg2[%c0_1, %c0_2] : memref<8x128xf32, #tpu.memory_space<vmem>>, vector<8x128xf32>
    tpu.vector_store %arg2[%c0_1, %c0_2], %2 {strides = array<i32>} : memref<8x128xf32, #tpu.memory_space<vmem>>, vector<8x128xf32>,
    %4 = vector.shape_cast %0 : vector<16x128xf32> to vector<2x8x128xf32>
    %cst_3 = arith.constant dense<0xFF800000> : vector<8x128xf32>
    %5 = vector.multi_reduction <maximumf>, %4, %cst_3 [0] : vector<2x8x128xf32> to vector<8x128xf32>
    %c0_4 = arith.constant 0 : index
    %c0_5 = arith.constant 0 : index
    %6 = vector.load %arg3[%c0_4, %c0_5] : memref<8x128xf32, #tpu.memory_space<vmem>>, vector<8x128xf32>
    tpu.vector_store %arg3[%c0_4, %c0_5], %5 {strides = array<i32>} : memref<8x128xf32, #tpu.memory_space<vmem>>, vector<8x128xf32>,
    return
  }
  func.func @transform_0(%arg0: i32) -> (i32, i32) {
    %c0_i32 = arith.constant 0 : i32
    %c0_i32_0 = arith.constant 0 : i32
    return %arg0, %c0_i32 : i32, i32
  }
  func.func @transform_1(%arg0: i32) -> (i32, i32) {
    %c0_i32 = arith.constant 0 : i32
    %c0_i32_0 = arith.constant 0 : i32
    return %arg0, %c0_i32 : i32, i32
  }
  func.func @transform_2(%arg0: i32) -> (i32, i32) {
    %c0_i32 = arith.constant 0 : i32
    %c0_i32_0 = arith.constant 0 : i32
    return %arg0, %c0_i32 : i32, i32
  }
}

module attributes {stable_mosaic.version = 11 : i64} {
  func.func @_fake_quant_kernel(%arg0: i32, %arg1: memref<3xf32, #tpu.memory_space<smem>>, %arg2: memref<16x128xf32, #tpu.memory_space<vmem>>, %arg3: memref<16x128xf32, #tpu.memory_space<vmem>>) attributes {dimension_semantics = [#tpu.dimension_semantics<parallel>], iteration_bounds = array<i64: 1>, scalar_prefetch = 0 : i64, scratch_operands = 0 : i64, tpu.core_type = #tpu.core_type<tc>, window_params = [{transform_indices = @transform_0, window_bounds = array<i64: 3>}, {transform_indices = @transform_1, window_bounds = array<i64: 16, 128>}, {transform_indices = @transform_2, window_bounds = array<i64: 16, 128>}]} {
    %c0 = arith.constant 0 : index
    %0 = memref.load %arg1[%c0] : memref<3xf32, #tpu.memory_space<smem>>
    %c1 = arith.constant 1 : index
    %1 = memref.load %arg1[%c1] : memref<3xf32, #tpu.memory_space<smem>>
    %c2 = arith.constant 2 : index
    %2 = memref.load %arg1[%c2] : memref<3xf32, #tpu.memory_space<smem>>
    %c0_0 = arith.constant 0 : index
    %c0_1 = arith.constant 0 : index
    %3 = vector.load %arg2[%c0_0, %c0_1] : memref<16x128xf32, #tpu.memory_space<vmem>>, vector<16x128xf32>
    %4 = vector.broadcast %0 : f32 to vector<16x128xf32>
    %5 = arith.mulf %3, %4 : vector<16x128xf32>
    %6 = math.roundeven %5 : vector<16x128xf32>
    %7 = vector.broadcast %1 : f32 to vector<16x128xf32>
    %8 = arith.addf %6, %7 : vector<16x128xf32>
    %cst = arith.constant -1.280000e+02 : f32
    %cst_2 = arith.constant 1.270000e+02 : f32
    %9 = vector.broadcast %cst : f32 to vector<16x128xf32>
    %10 = arith.maximumf %9, %8 : vector<16x128xf32>
    %11 = vector.broadcast %cst_2 : f32 to vector<16x128xf32>
    %12 = arith.minimumf %11, %10 : vector<16x128xf32>
    %13 = vector.broadcast %1 : f32 to vector<16x128xf32>
    %14 = arith.subf %12, %13 : vector<16x128xf32>
    %15 = vector.broadcast %2 : f32 to vector<16x128xf32>
    %16 = arith.mulf %14, %15 : vector<16x128xf32>
    %c0_3 = arith.constant 0 : index
    %c0_4 = arith.constant 0 : index
    %17 = vector.load %arg3[%c0_3, %c0_4] : memref<16x128xf32, #tpu.memory_space<vmem>>, vector<16x128xf32>
    tpu.vector_store %arg3[%c0_3, %c0_4], %16 {strides = array<i32>} : memref<16x128xf32, #tpu.memory_space<vmem>>, vector<16x128xf32>,
    return
  }
  func.func @transform_0(%arg0: i32) -> i32 {
    %c0_i32 = arith.constant 0 : i32
    %c0_i32_0 = arith.constant 0 : i32
    return %c0_i32 : i32
  }
  func.func @transform_1(%arg0: i32) -> (i32, i32) {
    %c0_i32 = arith.constant 0 : i32
    %c0_i32_0 = arith.constant 0 : i32
    return %arg0, %c0_i32 : i32, i32
  }
  func.func @transform_2(%arg0: i32) -> (i32, i32) {
    %c0_i32 = arith.constant 0 : i32
    %c0_i32_0 = arith.constant 0 : i32
    return %arg0, %c0_i32 : i32, i32
  }
}

</mosaic_0001>

<llo_original>
// kernel: fake_quantize.2
$region0: #{fake_quantize.2}
  #allocation0 [shape = 'u32[]', space=smem, size = 0x4, offset = 0x4, fixed_abs, tag = 'smem constant byte address 0x4 - core index']
  #allocation1 [shape = 'u32[144,128]{1,0:T(1,128)}', space=vmem, size = 0x12000, scoped, tag = 'internal scratch']
  %s0 = inlined_call_operand.vmem [shape: f32[16,128], index: 0, kind: input, shape index: {}]
  %s1 = inlined_call_operand.vmem [shape: f32[8,128], index: 1, kind: output, shape index: {0}]
  %s2 = inlined_call_operand.vmem [shape: f32[8,128], index: 2, kind: output, shape index: {1}]
  %3 = xla_tuple %s1, %s2
  %s4 = sld [smem:[#allocation0]]
  $region22: #{fake_quantize.2} parent=0
    _
  %s6 = ssub.s32 1, %s4
  %s7 = scalar_select 0, %s6, %s4
  // Predicated region
  $region2: #{fake_quantize.2} parent=0 // pred_check
    _
  $region3: #{fake_quantize.2} parent=0 // pred_check_branch
    %9 = sbr.rel (0) target = $region5
  $region4: #{fake_quantize.2} parent=0 // pred_region
    _
  $region5: #{fake_quantize.2} parent=0 // pred_fallthru
    _
  %v10 = vld [vmem:[%s0] sm:$0xff]
  %v11 = vld [vmem:[%s0 + $0x8] sm:$0xff]
  %v12 = vmin.f32 %v10, %v11
  %13 = vst [vmem:[%s1] sm:$0xff] %v12
  %v14 = vmax.f32 %v10, %v11
  %15 = vst [vmem:[%s2] sm:$0xff] %v14
  // Predicated region
  $region6: #{fake_quantize.2} parent=0 // pred_check
    _
  $region7: #{fake_quantize.2} parent=0 // pred_check_branch
    %17 = sbr.rel (0) target = $region9
  $region8: #{fake_quantize.2} parent=0 // pred_region
    _
  $region9: #{fake_quantize.2} parent=0 // pred_fallthru
    _
  // Predicated region
  $region10: #{fake_quantize.2} parent=0 // pred_check
    _
  $region11: #{fake_quantize.2} parent=0 // pred_check_branch
    %19 = sbr.rel (0) target = $region13
  $region12: #{fake_quantize.2} parent=0 // pred_region
    _
  $region13: #{fake_quantize.2} parent=0 // pred_fallthru
    _
  // Predicated region
  $region14: #{fake_quantize.2} parent=0 // pred_check
    _
  $region15: #{fake_quantize.2} parent=0 // pred_check_branch
    %21 = sbr.rel (0) target = $region17
  $region16: #{fake_quantize.2} parent=0 // pred_region
    _
  $region17: #{fake_quantize.2} parent=0 // pred_fallthru
    _
  // Predicated region
  $region18: #{fake_quantize.2} parent=0 // pred_check
    _
  $region19: #{fake_quantize.2} parent=0 // pred_check_branch
    %23 = sbr.rel (0) target = $region21
  $region20: #{fake_quantize.2} parent=0 // pred_region
    _
  $region21: #{fake_quantize.2} parent=0 // pred_fallthru
    _

// kernel: fake_quantize.3
$region0: #{fake_quantize.3}
  #allocation0 [shape = 'u32[]', space=smem, size = 0x4, offset = 0x4, fixed_abs, tag = 'smem constant byte address 0x4 - core index']
  #allocation1 [shape = 'u32[144,128]{1,0:T(1,128)}', space=vmem, size = 0x12000, scoped, tag = 'internal scratch']
  %s0 = inlined_call_operand.vmem [shape: f32[3], index: 0, kind: input, shape index: {}]
  %s1 = inlined_call_operand.vmem [shape: f32[16,128], index: 1, kind: input, shape index: {}]
  %s2 = inlined_call_operand.vmem [shape: f32[16,128], index: 2, kind: output, shape index: {}]
  %s3 = sld [smem:[#allocation0]]
  $region22: #{fake_quantize.3} parent=0
    _
  %s5 = ssub.s32 1, %s3
  %s6 = scalar_select 0, %s5, %s3
  $region1: #{fake_quantize.3} parent=0
    #allocation2 [shape = 'u8[512]{0}', space=smem, size = 0x200, scoped, tag = 'input window, operand 0, single buffered']
    #allocation3 [shape = 's32[1]{0}', space=sflag, size = 0x4, scoped, tag = 'scoped memory for fake_quantize.3']
    %7 = vsyncpa [#allocation3], 0
    // Predicated region
    $region2: #{fake_quantize.3} parent=1 // pred_check
      _
    $region3: #{fake_quantize.3} parent=1 // pred_check_branch
      %9 = sbr.rel (0) target = $region5
    $region4: #{fake_quantize.3} parent=1 // pred_region
      %s11 = ssub.s32 16, 16
      %12 = vsyncadd [#allocation3], %s11
      %s14 = sshll.u32 %s0, 4
      %s15 = int_to_ptr.vmem [resolvable:$true] %s14
      %17 = dma.vmem_to_smem %s15, 16, [#allocation2], [#allocation3]
    $region5: #{fake_quantize.3} parent=1 // pred_fallthru
      _
    // Predicated region
    $region6: #{fake_quantize.3} parent=1 // pred_check
      _
    $region7: #{fake_quantize.3} parent=1 // pred_check_branch
      %19 = sbr.rel (0) target = $region9
    $region8: #{fake_quantize.3} parent=1 // pred_region
      _
    $region9: #{fake_quantize.3} parent=1 // pred_fallthru
      _
    // Predicated region
    $region10: #{fake_quantize.3} parent=1 // pred_check
      _
    $region11: #{fake_quantize.3} parent=1 // pred_check_branch
      %21 = sbr.rel (0) target = $region13
    $region12: #{fake_quantize.3} parent=1 // pred_region
      %22 = dma.done [#allocation3], 16
    $region13: #{fake_quantize.3} parent=1 // pred_fallthru
      _
    %23 = sfence
    %s24 = sld [smem:[#allocation2]]
    %s25 = sld [smem:[#allocation2 + $0x1]]
    %s26 = sld [smem:[#allocation2 + $0x2]]
    %v27 = vld [vmem:[%s1] sm:$0xff]
    %v28 = vld [vmem:[%s1 + $0x8] sm:$0xff]
    %v29 = vstv %s24
    %v30 = vmul.f32 %v27, %v29
    %v31 = vmul.f32 %v28, %v29
    %v32 = vround.ne.pseudo %v30
    %v33 = vround.ne.pseudo %v31
    %v34 = vstv %s25
    %v35 = vadd.f32 %v32, %v34
    %v36 = vadd.f32 %v33, %v34
    %v37 = vmax.f32 %v35, -128.0
    %v38 = vmax.f32 %v36, -128.0
    %v39 = vmin.f32 %v37, 127.0
    %v40 = vmin.f32 %v38, 127.0
    %v41 = vsub.f32 %v39, %v34
    %v42 = vsub.f32 %v40, %v34
    %v43 = vstv %s26
    %v44 = vmul.f32 %v41, %v43
    %v45 = vmul.f32 %v42, %v43
    %46 = vst [vmem:[%s2] sm:$0xff] %v44
    %47 = vst [vmem:[%s2 + $0x8] sm:$0xff] %v45
    // Predicated region
    $region14: #{fake_quantize.3} parent=1 // pred_check
      _
    $region15: #{fake_quantize.3} parent=1 // pred_check_branch
      %49 = sbr.rel (0) target = $region17
    $region16: #{fake_quantize.3} parent=1 // pred_region
      _
    $region17: #{fake_quantize.3} parent=1 // pred_fallthru
      _
    // Predicated region
    $region18: #{fake_quantize.3} parent=1 // pred_check
      _
    $region19: #{fake_quantize.3} parent=1 // pred_check_branch
      %51 = sbr.rel (0) target = $region21
    $region20: #{fake_quantize.3} parent=1 // pred_region
      _
    $region21: #{fake_quantize.3} parent=1 // pred_fallthru
      _
    %52 = vsyncpa [#allocation3], 1

</llo_original>
